<compile_context>
chip_gen: v6e
topology: v6e:2x2x1
jax: 0.10.0
libtpu: 0.0.40
codegen_flags: <defaults>
</compile_context>

<pallas_src>
import jax
import jax.numpy as jnp
from jax.experimental import pallas as pl
from jax.experimental.pallas import tpu as pltpu

MASK_VALUE = -1e30  # plain Python float -> jaxpr literal, never a captured constant


# ----------------------------------------------------------------------------
# Fused decoder-step kernel (single pallas_call, no grid — everything fits VMEM)
# ----------------------------------------------------------------------------

def _decoder_step_kernel(tok_ref,            # VMEM (B, 1) int32 token ids
                         seqlen_ref,         # VMEM (B, 1) int32 valid lengths
                         emb_ref,            # VMEM (C, E) dense embedding table
                         wih_ref,            # VMEM (E, 3H) fused input->gates weight
                         whh_ref,            # VMEM (H, 3H) fused hidden->gates weight
                         bih_ref,            # VMEM (1, 3H)
                         bhh_ref,            # VMEM (1, 3H)
                         h_ref,              # VMEM (B, H) previous hidden state
                         enc_ref,            # VMEM (B, T, H) encoder outputs
                         out_ref):           # VMEM (B, P) packed output slab
    B, T, H = enc_ref.shape
    C, E = emb_ref.shape
    P = out_ref.shape[1]

    # --- 1. Embedding lookup: one-hot (iota==token) @ table on the MXU. ------
    # padding_idx=0 preserved because table row 0 is zero (as in nn.Embedding).
    class_iota = jax.lax.broadcasted_iota(jnp.int32, (B, C), 1)
    onehot = (class_iota == tok_ref[...]).astype(jnp.float32)            # (B, C)
    x = jnp.dot(onehot, emb_ref[...], preferred_element_type=jnp.float32)  # (B, E)

    h = h_ref[...]                                                        # (B, H)

    # --- 2. One GRU step (PyTorch GRUCell semantics), two fused matmuls. -----
    gi = jnp.dot(x, wih_ref[...], preferred_element_type=jnp.float32) + bih_ref[...]
    gh = jnp.dot(h, whh_ref[...], preferred_element_type=jnp.float32) + bhh_ref[...]
    r = jax.nn.sigmoid(gi[:, 0:H] + gh[:, 0:H])
    z = jax.nn.sigmoid(gi[:, H:2 * H] + gh[:, H:2 * H])
    n = jnp.tanh(gi[:, 2 * H:3 * H] + r * gh[:, 2 * H:3 * H])
    h_new = (1.0 - z) * n + z * h                                         # (B, H)

    # --- 3. Attention(method='dot'): score, mask_3d(-inf), softmax, context. -
    enc = enc_ref[...]                                                    # (B, T, H)
    scores = jnp.sum(enc * h_new[:, None, :], axis=-1)                    # (B, T) VPU+XLU

    t_idx = jax.lax.broadcasted_iota(jnp.int32, (B, T), 1)
    valid = t_idx < seqlen_ref[...]                                       # (B,1) bcast -> (B,T)
    scores = jnp.where(valid, scores, MASK_VALUE)   # finite mask: fully-masked row -> uniform, not NaN

    m = jnp.max(scores, axis=-1, keepdims=True)
    e = jnp.exp(scores - m)
    s = jnp.sum(e, axis=-1, keepdims=True)
    inv_s = 1.0 / s                                                       # exact reciprocal
    attn_w = e * inv_s                                                    # (B, T)
    ctx = jnp.sum(e[:, :, None] * enc, axis=1) * inv_s                    # (B, H), scale once

    # --- 4. decoder_output_fn = F.log_softmax (loss == 'NLL'). ---------------
    # TODO(synk): no output projection to n_classes exists in the module (forward is
    # abstract); log_softmax is applied to the GRU hidden state.
    mm = jnp.max(h_new, axis=-1, keepdims=True)
    sh = h_new - mm
    lse = jnp.log(jnp.sum(jnp.exp(sh), axis=-1, keepdims=True))
    logp = sh - lse                                                       # (B, H)

    # --- 5. Pack everything into one lane-dense slab: single unmasked store. -
    parts = [attn_w, ctx, h_new, logp]
    pad_w = P - (T + 3 * H)
    if pad_w > 0:
        parts.append(jnp.zeros((B, pad_w), jnp.float32))
    out_ref[...] = jnp.concatenate(parts, axis=-1)


# ----------------------------------------------------------------------------
# One-time parameter layout conversion (off the decode critical path)
# ----------------------------------------------------------------------------

def prepare_params(embedding, w_ih, w_hh, b_ih, b_hh):
    """Convert PyTorch-layout params (embedding (C,E); GRU (3H,E)/(3H,H)/(3H,))
    into kernel layout: dense (C,E) table, fused pre-transposed weights (E,3H)/(H,3H),
    biases (1,3H). Gate order [r, z, n] is preserved by the plain transpose."""
    H = w_hh.shape[1]
    return {
        "embedding": embedding,             # (C, E) — one dense tile, no (C,1,E) padding
        "w_ih": w_ih.T,                     # (E, 3H)
        "w_hh": w_hh.T,                     # (H, 3H)
        "b_ih": b_ih.reshape(1, 3 * H),
        "b_hh": b_hh.reshape(1, 3 * H),
    }


# ----------------------------------------------------------------------------
# Fused decoder step wrapper
# ----------------------------------------------------------------------------

@jax.jit
def decoder_step(params, tokens, h_prev, encoder_outputs, seq_len):
    B, T, H = encoder_outputs.shape
    C, E = params["embedding"].shape
    P = pl.cdiv(T + 3 * H, 128) * 128        # lane-dense packed output width

    vmem = pl.BlockSpec(memory_space=pltpu.MemorySpace.VMEM)

    flops = 2 * B * (C * E + E * 3 * H + H * 3 * H + 2 * T * H)
    bytes_accessed = 4 * (C * E + 3 * E * H + 3 * H * H + 6 * H
                          + B * H + B * T * H + 2 * B + B * P)
    cost = pl.CostEstimate(flops=flops,
                           transcendentals=B * (3 * H + T + H),
                           bytes_accessed=bytes_accessed)

    slab = pl.pallas_call(
        _decoder_step_kernel,
        out_shape=jax.ShapeDtypeStruct((B, P), jnp.float32),
        in_specs=[vmem] * 9,
        out_specs=vmem,
        cost_estimate=cost,
    )(tokens.astype(jnp.int32).reshape(B, 1),
      seq_len.astype(jnp.int32).reshape(B, 1),
      params["embedding"], params["w_ih"], params["w_hh"],
      params["b_ih"], params["b_hh"], h_prev, encoder_outputs)

    # Split the packed slab (pure layout plumbing, outside the kernel).
    attn_w = slab[:, 0:T]
    context = slab[:, T:T + H]
    h_new = slab[:, T + H:T + 2 * H]
    log_probs = slab[:, T + 2 * H:T + 3 * H]
    return attn_w, context, h_new, log_probs


# ----------------------------------------------------------------------------
# Pure-JAX reference (PyTorch layout) for validation
# ----------------------------------------------------------------------------

def decoder_step_ref(params, tokens, h_prev, encoder_outputs, seq_len):
    x = params["embedding"][tokens]
    gi = x @ params["w_ih"].T + params["b_ih"]
    gh = h_prev @ params["w_hh"].T + params["b_hh"]
    H = h_prev.shape[-1]
    r = jax.nn.sigmoid(gi[:, :H] + gh[:, :H])
    z = jax.nn.sigmoid(gi[:, H:2 * H] + gh[:, H:2 * H])
    n = jnp.tanh(gi[:, 2 * H:] + r * gh[:, 2 * H:])
    h_new = (1.0 - z) * n + z * h_prev

    scores = jnp.einsum("bth,bh->bt", encoder_outputs, h_new)
    t_idx = jnp.arange(encoder_outputs.shape[1])[None, :]
    scores = jnp.where(t_idx < seq_len[:, None], scores, -jnp.inf)
    attn_w = jax.nn.softmax(scores, axis=-1)
    context = jnp.einsum("bt,bth->bh", attn_w, encoder_outputs)
    log_probs = jax.nn.log_softmax(h_new, axis=-1)
    return attn_w, context, h_new, log_probs


# ----------------------------------------------------------------------------
# Main
# ----------------------------------------------------------------------------

if __name__ == "__main__":
    # config: batch_size=2, decoder_hidden=32, embedding_dim=32, n_classes=32,
    #         decoder='luong' (dot attention), decoder_layers=1, loss='NLL'
    B, T, H, E, C = 2, 8, 32, 32, 32

    key = jax.random.PRNGKey(0)
    k = jax.random.split(key, 8)
    scale = 1.0 / jnp.sqrt(H)

    embedding = jax.random.normal(k[0], (C, E), jnp.float32) * 0.1
    embedding = embedding.at[0].set(0.0)  # padding_idx=0

    torch_params = {
        "embedding": embedding,
        "w_ih": jax.random.uniform(k[1], (3 * H, E), jnp.float32, -scale, scale),
        "w_hh": jax.random.uniform(k[2], (3 * H, H), jnp.float32, -scale, scale),
        "b_ih": jax.random.uniform(k[3], (3 * H,), jnp.float32, -scale, scale),
        "b_hh": jax.random.uniform(k[4], (3 * H,), jnp.float32, -scale, scale),
    }
    kernel_params = prepare_params(torch_params["embedding"], torch_params["w_ih"],
                                   torch_params["w_hh"], torch_params["b_ih"],
                                   torch_params["b_hh"])

    tokens = jax.random.randint(k[5], (B,), 1, C, dtype=jnp.int32)
    h_prev = jax.random.normal(k[6], (B, H), jnp.float32) * 0.1
    encoder_outputs = jax.random.normal(k[7], (B, T, H), jnp.float32) * 0.1
    seq_len = jnp.array([T, T - 3], dtype=jnp.int32)

    outs = decoder_step(kernel_params, tokens, h_prev, encoder_outputs, seq_len)
    outs = jax.block_until_ready(outs)

    refs = decoder_step_ref(torch_params, tokens, h_prev, encoder_outputs, seq_len)

    for name, o, r in zip(["attn_w", "context", "h_new", "log_probs"], outs, refs):
        assert jnp.allclose(o, r, atol=2e-3, rtol=2e-3), (name, o, r)

    print("KERNEL_OK")
</pallas_src>

<mosaic_0001>
module attributes {stable_mosaic.version = 11 : i64} {
  func.func @_decoder_step_kernel(%arg0: memref<2x1xi32, #tpu.memory_space<vmem>>, %arg1: memref<2x1xi32, #tpu.memory_space<vmem>>, %arg2: memref<32x32xf32, #tpu.memory_space<vmem>>, %arg3: memref<32x96xf32, #tpu.memory_space<vmem>>, %arg4: memref<32x96xf32, #tpu.memory_space<vmem>>, %arg5: memref<1x96xf32, #tpu.memory_space<vmem>>, %arg6: memref<1x96xf32, #tpu.memory_space<vmem>>, %arg7: memref<2x32xf32, #tpu.memory_space<vmem>>, %arg8: memref<2x8x32xf32, #tpu.memory_space<vmem>>, %arg9: memref<2x128xf32, #tpu.memory_space<vmem>>) attributes {dimension_semantics = [], scalar_prefetch = 0 : i64, scratch_operands = 0 : i64, tpu.core_type = #tpu.core_type<tc>} {
    %0 = tpu.iota {dimensions = array<i32: 1>} : vector<2x32xi32>
    %c0 = arith.constant 0 : index
    %c0_0 = arith.constant 0 : index
    %1 = vector.load %arg0[%c0, %c0_0] : memref<2x1xi32, #tpu.memory_space<vmem>>, vector<2x1xi32>
    %2 = vector.broadcast %1 : vector<2x1xi32> to vector<2x32xi32>
    %3 = arith.cmpi eq, %0, %2 : vector<2x32xi32>
    %4 = arith.extui %3 : vector<2x32xi1> to vector<2x32xi32>
    %5 = arith.sitofp %4 : vector<2x32xi32> to vector<2x32xf32>
    %c0_1 = arith.constant 0 : index
    %c0_2 = arith.constant 0 : index
    %6 = vector.load %arg2[%c0_1, %c0_2] : memref<32x32xf32, #tpu.memory_space<vmem>>, vector<32x32xf32>
    %cst = arith.constant dense<0.000000e+00> : vector<2x32xf32>
    %7 = tpu.matmul %5, %6, %cst {dimension_numbers = #tpu.dot_dimension_numbers<[1], [0], [0], [1], [0, 0, 1, 1], [], []>} : vector<2x32xf32>, vector<32x32xf32>, vector<2x32xf32> -> vector<2x32xf32>
    %c0_3 = arith.constant 0 : index
    %c0_4 = arith.constant 0 : index
    %8 = vector.load %arg7[%c0_3, %c0_4] : memref<2x32xf32, #tpu.memory_space<vmem>>, vector<2x32xf32>
    %c0_5 = arith.constant 0 : index
    %c0_6 = arith.constant 0 : index
    %9 = vector.load %arg3[%c0_5, %c0_6] : memref<32x96xf32, #tpu.memory_space<vmem>>, vector<32x96xf32>
    %cst_7 = arith.constant dense<0.000000e+00> : vector<2x96xf32>
    %10 = tpu.matmul %7, %9, %cst_7 {dimension_numbers = #tpu.dot_dimension_numbers<[1], [0], [0], [1], [0, 0, 1, 1], [], []>} : vector<2x32xf32>, vector<32x96xf32>, vector<2x96xf32> -> vector<2x96xf32>
    %c0_8 = arith.constant 0 : index
    %c0_9 = arith.constant 0 : index
    %11 = vector.load %arg5[%c0_8, %c0_9] : memref<1x96xf32, #tpu.memory_space<vmem>>, vector<1x96xf32>
    %12 = vector.broadcast %11 : vector<1x96xf32> to vector<2x96xf32>
    %13 = arith.addf %10, %12 : vector<2x96xf32>
    %c0_10 = arith.constant 0 : index
    %c0_11 = arith.constant 0 : index
    %14 = vector.load %arg4[%c0_10, %c0_11] : memref<32x96xf32, #tpu.memory_space<vmem>>, vector<32x96xf32>
    %cst_12 = arith.constant dense<0.000000e+00> : vector<2x96xf32>
    %15 = tpu.matmul %8, %14, %cst_12 {dimension_numbers = #tpu.dot_dimension_numbers<[1], [0], [0], [1], [0, 0, 1, 1], [], []>} : vector<2x32xf32>, vector<32x96xf32>, vector<2x96xf32> -> vector<2x96xf32>
    %c0_13 = arith.constant 0 : index
    %c0_14 = arith.constant 0 : index
    %16 = vector.load %arg6[%c0_13, %c0_14] : memref<1x96xf32, #tpu.memory_space<vmem>>, vector<1x96xf32>
    %17 = vector.broadcast %16 : vector<1x96xf32> to vector<2x96xf32>
    %18 = arith.addf %15, %17 : vector<2x96xf32>
    %19 = vector.extract_strided_slice %13 {offsets = [0, 0], sizes = [2, 32], strides = [1, 1]} : vector<2x96xf32> to vector<2x32xf32>
    %20 = vector.extract_strided_slice %18 {offsets = [0, 0], sizes = [2, 32], strides = [1, 1]} : vector<2x96xf32> to vector<2x32xf32>
    %21 = arith.addf %19, %20 : vector<2x32xf32>
    %22 = arith.negf %21 : vector<2x32xf32>
    %23 = math.exp %22 : vector<2x32xf32>
    %cst_15 = arith.constant 1.000000e+00 : f32
    %24 = vector.broadcast %cst_15 : f32 to vector<2x32xf32>
    %25 = arith.addf %24, %23 : vector<2x32xf32>
    %26 = arith.divf %24, %25 : vector<2x32xf32>
    %27 = vector.extract_strided_slice %13 {offsets = [0, 32], sizes = [2, 32], strides = [1, 1]} : vector<2x96xf32> to vector<2x32xf32>
    %28 = vector.extract_strided_slice %18 {offsets = [0, 32], sizes = [2, 32], strides = [1, 1]} : vector<2x96xf32> to vector<2x32xf32>
    %29 = arith.addf %27, %28 : vector<2x32xf32>
    %30 = arith.negf %29 : vector<2x32xf32>
    %31 = math.exp %30 : vector<2x32xf32>
    %cst_16 = arith.constant 1.000000e+00 : f32
    %32 = vector.broadcast %cst_16 : f32 to vector<2x32xf32>
    %33 = arith.addf %32, %31 : vector<2x32xf32>
    %34 = arith.divf %32, %33 : vector<2x32xf32>
    %35 = vector.extract_strided_slice %13 {offsets = [0, 64], sizes = [2, 32], strides = [1, 1]} : vector<2x96xf32> to vector<2x32xf32>
    %36 = vector.extract_strided_slice %18 {offsets = [0, 64], sizes = [2, 32], strides = [1, 1]} : vector<2x96xf32> to vector<2x32xf32>
    %37 = arith.mulf %26, %36 : vector<2x32xf32>
    %38 = arith.addf %35, %37 : vector<2x32xf32>
    %39 = math.tanh %38 : vector<2x32xf32>
    %cst_17 = arith.constant 1.000000e+00 : f32
    %40 = vector.broadcast %cst_17 : f32 to vector<2x32xf32>
    %41 = arith.subf %40, %34 : vector<2x32xf32>
    %42 = arith.mulf %41, %39 : vector<2x32xf32>
    %43 = arith.mulf %34, %8 : vector<2x32xf32>
    %44 = arith.addf %42, %43 : vector<2x32xf32>
    %c0_18 = arith.constant 0 : index
    %c0_19 = arith.constant 0 : index
    %c0_20 = arith.constant 0 : index
    %45 = vector.load %arg8[%c0_18, %c0_19, %c0_20] : memref<2x8x32xf32, #tpu.memory_space<vmem>>, vector<2x8x32xf32>
    %46 = vector.shape_cast %44 : vector<2x32xf32> to vector<2x1x32xf32>
    %47 = vector.broadcast %46 : vector<2x1x32xf32> to vector<2x8x32xf32>
    %48 = arith.mulf %45, %47 : vector<2x8x32xf32>
    %cst_21 = arith.constant dense<0.000000e+00> : vector<2x8xf32>
    %49 = vector.multi_reduction <add>, %48, %cst_21 [2] : vector<2x8x32xf32> to vector<2x8xf32>
    %50 = tpu.iota {dimensions = array<i32: 1>} : vector<2x8xi32>
    %c0_22 = arith.constant 0 : index
    %c0_23 = arith.constant 0 : index
    %51 = vector.load %arg1[%c0_22, %c0_23] : memref<2x1xi32, #tpu.memory_space<vmem>>, vector<2x1xi32>
    %52 = vector.broadcast %51 : vector<2x1xi32> to vector<2x8xi32>
    %53 = arith.cmpi slt, %50, %52 : vector<2x8xi32>
    %cst_24 = arith.constant -1.000000e+30 : f32
    %54 = vector.broadcast %cst_24 : f32 to vector<2x8xf32>
    %55 = arith.select %53, %49, %54 : vector<2x8xi1>, vector<2x8xf32>
    %cst_25 = arith.constant dense<0xFF800000> : vector<2xf32>
    %56 = vector.multi_reduction <maximumf>, %55, %cst_25 [1] : vector<2x8xf32> to vector<2xf32>
    %57 = vector.shape_cast %56 : vector<2xf32> to vector<2x1xf32>
    %58 = vector.broadcast %57 : vector<2x1xf32> to vector<2x8xf32>
    %59 = arith.subf %55, %58 : vector<2x8xf32>
    %60 = math.exp %59 : vector<2x8xf32>
    %cst_26 = arith.constant dense<0.000000e+00> : vector<2xf32>
    %61 = vector.multi_reduction <add>, %60, %cst_26 [1] : vector<2x8xf32> to vector<2xf32>
    %62 = vector.shape_cast %61 : vector<2xf32> to vector<2x1xf32>
    %cst_27 = arith.constant 1.000000e+00 : f32
    %63 = vector.broadcast %cst_27 : f32 to vector<2x1xf32>
    %64 = arith.divf %63, %62 : vector<2x1xf32>
    %65 = vector.broadcast %64 : vector<2x1xf32> to vector<2x8xf32>
    %66 = arith.mulf %60, %65 : vector<2x8xf32>
    %67 = vector.shape_cast %60 : vector<2x8xf32> to vector<2x8x1xf32>
    %68 = vector.broadcast %67 : vector<2x8x1xf32> to vector<2x8x32xf32>
    %69 = arith.mulf %68, %45 : vector<2x8x32xf32>
    %cst_28 = arith.constant dense<0.000000e+00> : vector<2x32xf32>
    %70 = vector.multi_reduction <add>, %69, %cst_28 [1] : vector<2x8x32xf32> to vector<2x32xf32>
    %71 = vector.broadcast %64 : vector<2x1xf32> to vector<2x32xf32>
    %72 = arith.mulf %70, %71 : vector<2x32xf32>
    %cst_29 = arith.constant dense<0xFF800000> : vector<2xf32>
    %73 = vector.multi_reduction <maximumf>, %44, %cst_29 [1] : vector<2x32xf32> to vector<2xf32>
    %74 = vector.shape_cast %73 : vector<2xf32> to vector<2x1xf32>
    %75 = vector.broadcast %74 : vector<2x1xf32> to vector<2x32xf32>
    %76 = arith.subf %44, %75 : vector<2x32xf32>
    %77 = math.exp %76 : vector<2x32xf32>
    %cst_30 = arith.constant dense<0.000000e+00> : vector<2xf32>
    %78 = vector.multi_reduction <add>, %77, %cst_30 [1] : vector<2x32xf32> to vector<2xf32>
    %79 = vector.shape_cast %78 : vector<2xf32> to vector<2x1xf32>
    %80 = math.log %79 : vector<2x1xf32>
    %81 = vector.broadcast %80 : vector<2x1xf32> to vector<2x32xf32>
    %82 = arith.subf %76, %81 : vector<2x32xf32>
    %cst_31 = arith.constant 0.000000e+00 : f32
    %83 = vector.broadcast %cst_31 : f32 to vector<2x24xf32>
    %84 = tpu.concatenate %66, %72, %44, %82, %83 in 1 : vector<2x8xf32>, vector<2x32xf32>, vector<2x32xf32>, vector<2x32xf32>, vector<2x24xf32> -> vector<2x128xf32>
    %c0_32 = arith.constant 0 : index
    %c0_33 = arith.constant 0 : index
    %85 = vector.load %arg9[%c0_32, %c0_33] : memref<2x128xf32, #tpu.memory_space<vmem>>, vector<2x128xf32>
    tpu.vector_store %arg9[%c0_32, %c0_33], %84 {strides = array<i32>} : memref<2x128xf32, #tpu.memory_space<vmem>>, vector<2x128xf32>,
    return
  }
}

</mosaic_0001>

<llo_original>
// kernel: decoder_step.1
$region0: #{decoder_step.1}
  #allocation0 [shape = 'u32[]', space=smem, size = 0x4, offset = 0x4, fixed_abs, tag = 'smem constant byte address 0x4 - core index']
  #allocation1 [shape = 'u32[144,128]{1,0:T(1,128)}', space=vmem, size = 0x12000, scoped, tag = 'internal scratch']
  %s0 = inlined_call_operand.vmem [shape: s32[2,1], index: 0, kind: input, shape index: {}]
  %s1 = inlined_call_operand.vmem [shape: s32[2,1], index: 1, kind: input, shape index: {}]
  %s2 = inlined_call_operand.hbm [shape: f32[32,32], index: 2, kind: input, shape index: {}]
  %s3 = inlined_call_operand.hbm [shape: f32[32,96], index: 3, kind: input, shape index: {}]
  %s4 = inlined_call_operand.hbm [shape: f32[32,96], index: 4, kind: input, shape index: {}]
  %s5 = inlined_call_operand.vmem [shape: f32[1,96], index: 5, kind: input, shape index: {}]
  %s6 = inlined_call_operand.vmem [shape: f32[1,96], index: 6, kind: input, shape index: {}]
  %s7 = inlined_call_operand.vmem [shape: f32[2,32], index: 7, kind: input, shape index: {}]
  %s8 = inlined_call_operand.vmem [shape: f32[2,8,32], index: 8, kind: input, shape index: {}]
  %s9 = inlined_call_operand.vmem [shape: f32[2,128], index: 9, kind: output, shape index: {}]
  %s10 = sld [smem:[#allocation0]]
  $region58: #{decoder_step.1} parent=0
    _
  %s12 = ssub.s32 1, %s10
  %s13 = scalar_select 0, %s12, %s10
  $region1: #{decoder_step.1} parent=0
    #allocation2 [shape = 'u8[16384]{0}', space=vmem, size = 0x4000, scoped, tag = 'input window, operand 2, single buffered']
    #allocation3 [shape = 's32[1]{0}', space=sflag, size = 0x4, scoped, tag = 'scoped memory for decoder_step.1']
    #allocation4 [shape = 'u8[16384]{0}', space=vmem, size = 0x4000, scoped, tag = 'input window, operand 3, single buffered']
    #allocation5 [shape = 's32[1]{0}', space=sflag, size = 0x4, scoped, tag = 'scoped memory for decoder_step.1']
    #allocation6 [shape = 'u8[16384]{0}', space=vmem, size = 0x4000, scoped, tag = 'input window, operand 4, single buffered']
    %14 = vsyncpa [#allocation3], 0
    %15 = vsyncpa [#allocation5], 0
    // Predicated region
    $region2: #{decoder_step.1} parent=1 // pred_check
      _
    $region3: #{decoder_step.1} parent=1 // pred_check_branch
      %17 = sbr.rel (0) target = $region5
    $region4: #{decoder_step.1} parent=1 // pred_region
      _
    $region5: #{decoder_step.1} parent=1 // pred_fallthru
      _
    // Predicated region
    $region6: #{decoder_step.1} parent=1 // pred_check
      _
    $region7: #{decoder_step.1} parent=1 // pred_check_branch
      %19 = sbr.rel (0) target = $region9
    $region8: #{decoder_step.1} parent=1 // pred_region
      _
    $region9: #{decoder_step.1} parent=1 // pred_fallthru
      _
    // Predicated region
    $region10: #{decoder_step.1} parent=1 // pred_check
      _
    $region11: #{decoder_step.1} parent=1 // pred_check_branch
      %21 = sbr.rel (0) target = $region13
    $region12: #{decoder_step.1} parent=1 // pred_region
      %s23 = ssub.s32 512, 512
      %24 = vsyncadd [#allocation3], %s23
      %s25 = sshll.u32 [#allocation2], 4
      %s26 = int_to_ptr.vmem [resolvable:$true] %s25
      %31 = dma.hbm_to_vmem [thread:$0]  %s2, 512, %s26, [#allocation3], 128, 128, 8
    $region13: #{decoder_step.1} parent=1 // pred_fallthru
      _
    // Predicated region
    $region14: #{decoder_step.1} parent=1 // pred_check
      _
    $region15: #{decoder_step.1} parent=1 // pred_check_branch
      %33 = sbr.rel (0) target = $region17
    $region16: #{decoder_step.1} parent=1 // pred_region
      %s35 = ssub.s32 512, 512
      %36 = vsyncadd [#allocation5], %s35
      %s37 = sshll.u32 [#allocation4], 4
      %s38 = int_to_ptr.vmem [resolvable:$true] %s37
      %43 = dma.hbm_to_vmem [thread:$0]  %s3, 512, %s38, [#allocation5], 128, 128, 8
    $region17: #{decoder_step.1} parent=1 // pred_fallthru
      _
    // Predicated region
    $region18: #{decoder_step.1} parent=1 // pred_check
      _
    $region19: #{decoder_step.1} parent=1 // pred_check_branch
      %45 = sbr.rel (0) target = $region21
    $region20: #{decoder_step.1} parent=1 // pred_region
      %s47 = ssub.s32 512, 512
      %48 = vsyncadd [#allocation5], %s47
      %s49 = sshll.u32 [#allocation6], 4
      %s50 = int_to_ptr.vmem [resolvable:$true] %s49
      %55 = dma.hbm_to_vmem [thread:$0]  %s4, 512, %s50, [#allocation5], 128, 128, 8
    $region21: #{decoder_step.1} parent=1 // pred_fallthru
      _
    // Predicated region
    $region22: #{decoder_step.1} parent=1 // pred_check
      _
    $region23: #{decoder_step.1} parent=1 // pred_check_branch
      %57 = sbr.rel (0) target = $region25
    $region24: #{decoder_step.1} parent=1 // pred_region
      _
    $region25: #{decoder_step.1} parent=1 // pred_fallthru
      _
    // Predicated region
    $region26: #{decoder_step.1} parent=1 // pred_check
      _
    $region27: #{decoder_step.1} parent=1 // pred_check_branch
      %59 = sbr.rel (0) target = $region29
    $region28: #{decoder_step.1} parent=1 // pred_region
      _
    $region29: #{decoder_step.1} parent=1 // pred_fallthru
      _
    // Predicated region
    $region30: #{decoder_step.1} parent=1 // pred_check
      _
    $region31: #{decoder_step.1} parent=1 // pred_check_branch
      %61 = sbr.rel (0) target = $region33
    $region32: #{decoder_step.1} parent=1 // pred_region
      _
    $region33: #{decoder_step.1} parent=1 // pred_fallthru
      _
    // Predicated region
    $region34: #{decoder_step.1} parent=1 // pred_check
      _
    $region35: #{decoder_step.1} parent=1 // pred_check_branch
      %63 = sbr.rel (0) target = $region37
    $region36: #{decoder_step.1} parent=1 // pred_region
      _
    $region37: #{decoder_step.1} parent=1 // pred_fallthru
      _
    // Predicated region
    $region38: #{decoder_step.1} parent=1 // pred_check
      _
    $region39: #{decoder_step.1} parent=1 // pred_check_branch
      %65 = sbr.rel (0) target = $region41
    $region40: #{decoder_step.1} parent=1 // pred_region
      %66 = dma.done [#allocation3], 512
    $region41: #{decoder_step.1} parent=1 // pred_fallthru
      _
    // Predicated region
    $region42: #{decoder_step.1} parent=1 // pred_check
      _
    $region43: #{decoder_step.1} parent=1 // pred_check_branch
      %68 = sbr.rel (0) target = $region45
    $region44: #{decoder_step.1} parent=1 // pred_region
      %69 = dma.done [#allocation5], 512
    $region45: #{decoder_step.1} parent=1 // pred_fallthru
      _
    // Predicated region
    $region46: #{decoder_step.1} parent=1 // pred_check
      _
    $region47: #{decoder_step.1} parent=1 // pred_check_branch
      %71 = sbr.rel (0) target = $region49
    $region48: #{decoder_step.1} parent=1 // pred_region
      %72 = dma.done [#allocation5], 512
    $region49: #{decoder_step.1} parent=1 // pred_fallthru
      _
    %v73 = vlaneseq
    %v74 = vand.u32 %v73, 127
    %v75 = vld [vmem:[%s0] sm:$0x3]
    %76 = vset.pattern.permute.xlu0 0
    %77 = vperm.xlu0 %76, %v75
    %v78 = vpop.permute.xlu0 %77
    %vm79 = vcmp.eq.s32.totalorder %v74, %v78
    %v80 = vsel %vm79, 1, 0
    %v81 = vcvt.s32.f32 %v80
    %v82 = vld [vmem:[#allocation2] sm:$0xff]
    %v83 = vld [vmem:[#allocation2 + $0x8] sm:$0xff]
    %v84 = vld [vmem:[#allocation2 + $0x10] sm:$0xff]
    %v85 = vld [vmem:[#allocation2 + $0x18] sm:$0xff]
    %vm86 = vcmask 261120
    %v88 = vsel %vm86, %v81, 0
    %90 = vmatprep.subr.mxu0 0.0
    %91 = vmatpush1.msra.mxu0 0.0
    %92 = vmatprep.subr.mxu0 0.0
    %93 = vmatpush1.msra.mxu0 0.0
    %94 = vmatprep.subr.mxu0 0.0
    %95 = vmatpush1.msra.mxu0 0.0
    %96 = vmatprep.subr.mxu0 0.0
    %97 = vmatpush1.msra.mxu0 0.0
    %98 = vmatprep.subr.mxu0 0.0
    %99 = vmatpush1.msra.mxu0 0.0
    %100 = vmatprep.subr.mxu0 0.0
    %101 = vmatpush1.msra.mxu0 0.0
    %102 = vmatprep.subr.mxu0 0.0
    %103 = vmatpush1.msra.mxu0 0.0
    %104 = vmatprep.subr.mxu0 0.0
    %105 = vmatpush1.msra.mxu0 0.0
    %106 = vmatprep.subr.mxu0 0.0
    %107 = vmatpush1.msra.mxu0 0.0
    %108 = vmatprep.subr.mxu0 0.0
    %109 = vmatpush1.msra.mxu0 0.0
    %110 = vmatprep.subr.mxu0 0.0
    %111 = vmatpush1.msra.mxu0 0.0
    %112 = vmatprep.subr.mxu0 0.0
    %113 = vmatpush1.msra.mxu0 0.0
    %114 = vmatprep.subr.mxu0 0.0
    %115 = vmatpush1.msra.mxu0 %v85
    %116 = vmatprep.subr.mxu0 0.0
    %117 = vmatpush1.msra.mxu0 %v84
    %118 = vmatprep.subr.mxu0 0.0
    %119 = vmatpush1.msra.mxu0 %v83
    %120 = vmatprep.subr.mxu0 0.0
    %121 = vmatpush1.msra.mxu0 %v82
    %122 = vmatprep.subr.mxu0 0.0
    %123 = vmatpush2.msra.mxu0 0.0
    %124 = vmatprep.subr.mxu0 0.0
    %125 = vmatpush2.msra.mxu0 0.0
    %126 = vmatprep.subr.mxu0 0.0
    %127 = vmatpush2.msra.mxu0 0.0
    %128 = vmatprep.subr.mxu0 0.0
    %129 = vmatpush2.msra.mxu0 0.0
    %130 = vmatprep.subr.mxu0 0.0
    %131 = vmatpush2.msra.mxu0 0.0
    %132 = vmatprep.subr.mxu0 0.0
    %133 = vmatpush2.msra.mxu0 0.0
    %134 = vmatprep.subr.mxu0 0.0
    %135 = vmatpush2.msra.mxu0 0.0
    %136 = vmatprep.subr.mxu0 0.0
    %137 = vmatpush2.msra.mxu0 0.0
    %138 = vmatprep.subr.mxu0 0.0
    %139 = vmatpush2.msra.mxu0 0.0
    %140 = vmatprep.subr.mxu0 0.0
    %141 = vmatpush2.msra.mxu0 0.0
    %142 = vmatprep.subr.mxu0 0.0
    %143 = vmatpush2.msra.mxu0 0.0
    %144 = vmatprep.subr.mxu0 0.0
    %145 = vmatpush2.msra.mxu0 0.0
    %146 = vmatprep.subr.mxu0 0.0
    %147 = vmatpush2.msra.mxu0 0.0
    %148 = vmatprep.subr.mxu0 0.0
    %149 = vmatpush2.msra.mxu0 0.0
    %150 = vmatprep.subr.mxu0 0.0
    %151 = vmatpush2.msra.mxu0 0.0
    %152 = vmatprep.subr.mxu0 0.0
    %153 = vmatpush2.msra.mxu0 0.0
    %154 = vmatprep.mubr.f32.mxu0 0.0
    %155 = vmatmul.mubr.f32.gmra.mxu0 %v88
    %v156 = vpop.f32.mrf.mxu0
    %v157 = vadd.f32 0.0, %v156
    %v158 = vpop.f32.mrf.mxu0
    %159 = vdwg.mxu0
    %v160 = vld [vmem:[%s7] sm:$0x3]
    %v161 = vld [vmem:[#allocation4] sm:$0xff]
    %v162 = vld [vmem:[#allocation4 + $0x8] sm:$0xff]
    %v163 = vld [vmem:[#allocation4 + $0x10] sm:$0xff]
    %v164 = vld [vmem:[#allocation4 + $0x18] sm:$0xff]
    %v165 = vld [vmem:[%s5] sm:$0x1]
    %v167 = vlaneseq
    %v168 = vshrl.u32 %v167, 7
    %v169 = vsub.s32 0, %v168
    %v170 = vrot.slane %v165, %v169
    %v173 = vsel %vm86, %v157, 0
    %175 = vmatprep.subr.mxu0 0.0
    %176 = vmatpush1.msra.mxu0 0.0
    %177 = vmatprep.subr.mxu0 0.0
    %178 = vmatpush1.msra.mxu0 0.0
    %179 = vmatprep.subr.mxu0 0.0
    %180 = vmatpush1.msra.mxu0 0.0
    %181 = vmatprep.subr.mxu0 0.0
    %182 = vmatpush1.msra.mxu0 0.0
    %183 = vmatprep.subr.mxu0 0.0
    %184 = vmatpush1.msra.mxu0 0.0
    %185 = vmatprep.subr.mxu0 0.0
    %186 = vmatpush1.msra.mxu0 0.0
    %187 = vmatprep.subr.mxu0 0.0
    %188 = vmatpush1.msra.mxu0 0.0
    %189 = vmatprep.subr.mxu0 0.0
    %190 = vmatpush1.msra.mxu0 0.0
    %191 = vmatprep.subr.mxu0 0.0
    %192 = vmatpush1.msra.mxu0 0.0
    %193 = vmatprep.subr.mxu0 0.0
    %194 = vmatpush1.msra.mxu0 0.0
    %195 = vmatprep.subr.mxu0 0.0
    %196 = vmatpush1.msra.mxu0 0.0
    %197 = vmatprep.subr.mxu0 0.0
    %198 = vmatpush1.msra.mxu0 0.0
    %199 = vmatprep.subr.mxu0 0.0
    %200 = vmatpush1.msra.mxu0 %v164
    %201 = vmatprep.subr.mxu0 0.0
    %202 = vmatpush1.msra.mxu0 %v163
    %203 = vmatprep.subr.mxu0 0.0
    %204 = vmatpush1.msra.mxu0 %v162
    %205 = vmatprep.subr.mxu0 0.0
    %206 = vmatpush1.msra.mxu0 %v161
    %207 = vmatprep.subr.mxu0 0.0
    %208 = vmatpush2.msra.mxu0 0.0
    %209 = vmatprep.subr.mxu0 0.0
    %210 = vmatpush2.msra.mxu0 0.0
    %211 = vmatprep.subr.mxu0 0.0
    %212 = vmatpush2.msra.mxu0 0.0
    %213 = vmatprep.subr.mxu0 0.0
    %214 = vmatpush2.msra.mxu0 0.0
    %215 = vmatprep.subr.mxu0 0.0
    %216 = vmatpush2.msra.mxu0 0.0
    %217 = vmatprep.subr.mxu0 0.0
    %218 = vmatpush2.msra.mxu0 0.0
    %219 = vmatprep.subr.mxu0 0.0
    %220 = vmatpush2.msra.mxu0 0.0
    %221 = vmatprep.subr.mxu0 0.0
    %222 = vmatpush2.msra.mxu0 0.0
    %223 = vmatprep.subr.mxu0 0.0
    %224 = vmatpush2.msra.mxu0 0.0
    %225 = vmatprep.subr.mxu0 0.0
    %226 = vmatpush2.msra.mxu0 0.0
    %227 = vmatprep.subr.mxu0 0.0
    %228 = vmatpush2.msra.mxu0 0.0
    %229 = vmatprep.subr.mxu0 0.0
    %230 = vmatpush2.msra.mxu0 0.0
    %231 = vmatprep.subr.mxu0 0.0
    %232 = vmatpush2.msra.mxu0 0.0
    %233 = vmatprep.subr.mxu0 0.0
    %234 = vmatpush2.msra.mxu0 0.0
    %235 = vmatprep.subr.mxu0 0.0
    %236 = vmatpush2.msra.mxu0 0.0
    %237 = vmatprep.subr.mxu0 0.0
    %238 = vmatpush2.msra.mxu0 0.0
    %239 = vmatprep.mubr.f32.mxu0 0.0
    %240 = vmatmul.mubr.f32.gmra.mxu0 %v173
    %v241 = vpop.f32.mrf.mxu0
    %v242 = vadd.f32 %v170, %v241
    %v243 = vpop.f32.mrf.mxu0
    %244 = vdwg.mxu0
    %v245 = vld [vmem:[#allocation6] sm:$0xff]
    %v246 = vld [vmem:[#allocation6 + $0x8] sm:$0xff]
    %v247 = vld [vmem:[#allocation6 + $0x10] sm:$0xff]
    %v248 = vld [vmem:[#allocation6 + $0x18] sm:$0xff]
    %v249 = vld [vmem:[%s6] sm:$0x1]
    %v251 = vlaneseq
    %v252 = vshrl.u32 %v251, 7
    %v253 = vsub.s32 0, %v252
    %v254 = vrot.slane %v249, %v253
    %v257 = vsel %vm86, %v160, 0
    %259 = vmatprep.subr.mxu0 0.0
    %260 = vmatpush1.msra.mxu0 0.0
    %261 = vmatprep.subr.mxu0 0.0
    %262 = vmatpush1.msra.mxu0 0.0
    %263 = vmatprep.subr.mxu0 0.0
    %264 = vmatpush1.msra.mxu0 0.0
    %265 = vmatprep.subr.mxu0 0.0
    %266 = vmatpush1.msra.mxu0 0.0
    %267 = vmatprep.subr.mxu0 0.0
    %268 = vmatpush1.msra.mxu0 0.0
    %269 = vmatprep.subr.mxu0 0.0
    %270 = vmatpush1.msra.mxu0 0.0
    %271 = vmatprep.subr.mxu0 0.0
    %272 = vmatpush1.msra.mxu0 0.0
    %273 = vmatprep.subr.mxu0 0.0
    %274 = vmatpush1.msra.mxu0 0.0
    %275 = vmatprep.subr.mxu0 0.0
    %276 = vmatpush1.msra.mxu0 0.0
    %277 = vmatprep.subr.mxu0 0.0
    %278 = vmatpush1.msra.mxu0 0.0
    %279 = vmatprep.subr.mxu0 0.0
    %280 = vmatpush1.msra.mxu0 0.0
    %281 = vmatprep.subr.mxu0 0.0
    %282 = vmatpush1.msra.mxu0 0.0
    %283 = vmatprep.subr.mxu0 0.0
    %284 = vmatpush1.msra.mxu0 %v248
    %285 = vmatprep.subr.mxu0 0.0
    %286 = vmatpush1.msra.mxu0 %v247
    %287 = vmatprep.subr.mxu0 0.0
    %288 = vmatpush1.msra.mxu0 %v246
    %289 = vmatprep.subr.mxu0 0.0
    %290 = vmatpush1.msra.mxu0 %v245
    %291 = vmatprep.subr.mxu0 0.0
    %292 = vmatpush2.msra.mxu0 0.0
    %293 = vmatprep.subr.mxu0 0.0
    %294 = vmatpush2.msra.mxu0 0.0
    %295 = vmatprep.subr.mxu0 0.0
    %296 = vmatpush2.msra.mxu0 0.0
    %297 = vmatprep.subr.mxu0 0.0
    %298 = vmatpush2.msra.mxu0 0.0
    %299 = vmatprep.subr.mxu0 0.0
    %300 = vmatpush2.msra.mxu0 0.0
    %301 = vmatprep.subr.mxu0 0.0
    %302 = vmatpush2.msra.mxu0 0.0
    %303 = vmatprep.subr.mxu0 0.0
    %304 = vmatpush2.msra.mxu0 0.0
    %305 = vmatprep.subr.mxu0 0.0
    %306 = vmatpush2.msra.mxu0 0.0
    %307 = vmatprep.subr.mxu0 0.0
    %308 = vmatpush2.msra.mxu0 0.0
    %309 = vmatprep.subr.mxu0 0.0
    %310 = vmatpush2.msra.mxu0 0.0
    %311 = vmatprep.subr.mxu0 0.0
    %312 = vmatpush2.msra.mxu0 0.0
    %313 = vmatprep.subr.mxu0 0.0
    %314 = vmatpush2.msra.mxu0 0.0
    %315 = vmatprep.subr.mxu0 0.0
    %316 = vmatpush2.msra.mxu0 0.0
    %317 = vmatprep.subr.mxu0 0.0
    %318 = vmatpush2.msra.mxu0 0.0
    %319 = vmatprep.subr.mxu0 0.0
    %320 = vmatpush2.msra.mxu0 0.0
    %321 = vmatprep.subr.mxu0 0.0
    %322 = vmatpush2.msra.mxu0 0.0
    %323 = vmatprep.mubr.f32.mxu0 0.0
    %324 = vmatmul.mubr.f32.gmra.mxu0 %v257
    %v325 = vpop.f32.mrf.mxu0
    %v326 = vadd.f32 %v254, %v325
    %v327 = vpop.f32.mrf.mxu0
    %328 = vdwg.mxu0
    %v329 = vadd.f32 %v242, %v326
    %v330 = vxor.u32 %v329, 2147483648
    %v331 = vmul.f32 %v330, 1.442695
    %v332 = vpow.pop %v331
    %v333 = vadd.f32 %v332, 1.0
    %v334 = vrcp.pop %v333
    %v335 = vmul.f32 1.0, %v334
    %337 = vrot.lane.b32.xlu0 %v326, 64
    %v338 = vpop.permute.xlu0 %337
    %v340 = vmul.f32 %v335, %v338
    %342 = vrot.lane.b32.xlu0 %v340, 64
    %v343 = vpop.permute.xlu0 %342
    %v345 = vadd.f32 %v242, %v343
    %v346 = vtanh.pop %v345
    %v347 = vsub.f32 1.0, %v335
    %349 = vrot.lane.b32.xlu0 %v346, 96
    %v350 = vpop.permute.xlu0 %349
    %v352 = vmul.f32 %v347, %v350
    %353 = vrot.lane.b32.xlu0 %v160, 32
    %v354 = vpop.permute.xlu0 %353
    %v356 = vmul.f32 %v335, %v354
    %v357 = vadd.f32 %v352, %v356
    %v358 = vld [vmem:[%s8] sm:$0xff]
    %v359 = vld [vmem:[%s8 + $0x8] sm:$0xff]
    %v362 = vunpack.c.l.s4 1966171168
    %v363 = vunpack.c.0.s8 %v362
    %v364 = vlaneseq
    %v365 = vshrl.u32 %v364, 7
    %v366 = vsub.s32 %v363, %v365
    %v367 = vrot.slane %v357, %v366
    %v368 = vcombine.high %v367, %v367
    %v370 = vunpack.c.l.s4 1966171168
    %v371 = vunpack.c.0.s8 %v370
    %v372 = vlaneseq
    %v373 = vshrl.u32 %v372, 7
    %v374 = vsub.s32 %v371, %v373
    %v375 = vrot.slane %v367, %v374
    %v377 = vunpack.c.l.s4 1966171168
    %v378 = vunpack.c.0.s8 %v377
    %v379 = vlaneseq
    %v380 = vshrl.u32 %v379, 7
    %v381 = vsub.s32 %v378, %v380
    %v382 = vrot.slane %v368, %v381
    %v383 = vlaneseq
    %v384 = vshrl.u32 %v383, 7
    %v385 = vsub.s32 0, %v384
    %v386 = vrot.slane %v375, %v385
    %v387 = vlaneseq
    %v388 = vshrl.u32 %v387, 7
    %v389 = vsub.s32 0, %v388
    %v390 = vrot.slane %v382, %v389
    %391 = vrot.lane.b32.xlu0 %v386, 96
    %v392 = vpop.permute.xlu0 %391
    %393 = vrot.lane.b32.xlu0 %v390, 96
    %v394 = vpop.permute.xlu0 %393
    %v397 = vmul.f32 %v358, %v392
    %v398 = vmul.f32 %v359, %v394
    %v399 = vsel %vm86, %v397, 0.0
    %400 = vadd.xlane.f32.xlu0 %v399
    %v401 = vpop.xlane.xlu0 %400
    %v402 = vsel %vm86, %v398, 0.0
    %403 = vadd.xlane.f32.xlu0 %v402
    %v404 = vpop.xlane.xlu0 %403
    %v405 = vld [vmem:[%s1] sm:$0x3]
    %406 = vset.pattern.permute.xlu0 0
    %407 = vperm.xlu0 %406, %v405
    %v408 = vpop.permute.xlu0 %407
    %vm409 = vcmp.lt.s32.totalorder %v74, %v408
    %v412 = vlaneseq
    %v413 = vshrl.u32 %v412, 7
    %v414 = vsub.s32 %v74, %v413
    %v415 = vrot.slane %v401, %v414
    %v416 = vlaneseq
    %v417 = vshrl.u32 %v416, 7
    %v418 = vsub.s32 %v74, %v417
    %v419 = vrot.slane %v404, %v418
    %vm420 = vcmask 1041409
    %v421 = vsel %vm420, %v419, %v415
    %v423 = vsel %vm409, %v421, -1e+30
    %vm424 = vcmask 58368
    %v425 = vsel %vm424, %v423, -inf
    %426 = vmax.xlane.f32.xlu0 %v425
    %v427 = vpop.xlane.xlu0 %426
    %v428 = vsub.f32 %v423, %v427
    %v429 = vmul.f32 %v428, 1.442695
    %v430 = vpow.pop %v429
    %v431 = vsel %vm424, %v430, 0.0
    %432 = vadd.xlane.f32.xlu0 %v431
    %v433 = vpop.xlane.xlu0 %432
    %v434 = vrcp.pop %v433
    %v435 = vmul.f32 1.0, %v434
    %v436 = vmul.f32 %v430, %v435
    %v437 = vlaneseq
    %v438 = vshrl.u32 %v437, 7
    %v439 = vsub.s32 0, %v438
    %v440 = vrot.slane %v430, %v439
    %442 = vbcast.lane.b32.xlu0 %v440, 256
    %v443 = vpop.permute.xlu0 %442
    %v444 = vlaneseq
    %v445 = vshrl.u32 %v444, 7
    %v446 = vsub.s32 1, %v445
    %v447 = vrot.slane %v430, %v446
    %449 = vbcast.lane.b32.xlu0 %v447, 256
    %v450 = vpop.permute.xlu0 %449
    %v451 = vmul.f32 %v443, %v358
    %v452 = vmul.f32 %v450, %v359
    %v453 = vsel %vm86, %v451, 0.0
    %v454 = vrot.slane %v453, 4
    %v455 = vadd.f32 %v453, %v454
    %v456 = vrot.slane %v455, 2
    %v457 = vadd.f32 %v455, %v456
    %v458 = vrot.slane %v457, 1
    %v459 = vadd.f32 %v457, %v458
    %v460 = vsel %vm86, %v452, 0.0
    %v461 = vrot.slane %v460, 4
    %v462 = vadd.f32 %v460, %v461
    %v463 = vrot.slane %v462, 2
    %v464 = vadd.f32 %v462, %v463
    %v465 = vrot.slane %v464, 1
    %v466 = vadd.f32 %v464, %v465
    %v468 = vrot.slane %v435, 1
    %v471 = vmul.f32 %v459, %v435
    %v472 = vmul.f32 %v466, %v468
    %vm473 = vcmask 517376
    %v474 = vsel %vm473, %v357, -inf
    %475 = vmax.xlane.f32.xlu0 %v474
    %v476 = vpop.xlane.xlu0 %475
    %v477 = vsub.f32 %v357, %v476
    %v478 = vmul.f32 %v477, 1.442695
    %v479 = vpow.pop %v478
    %481 = vrot.lane.b32.xlu0 %v479, 96
    %v482 = vpop.permute.xlu0 %481
    %vm484 = vcmask 254976
    %v485 = vsel %vm484, %v482, 0.0
    %486 = vadd.xlane.f32.xlu0 %v485
    %v487 = vpop.xlane.xlu0 %486
    %v488 = vlog2.pop %v487
    %v489 = vmul.f32 %v488, 0.6931472
    %v490 = vsub.f32 %v477, %v489
    %v493 = vrot.slane %v472, 7
    %v494 = vsel %vm420, %v493, %v471
    %495 = vrot.lane.b32.xlu0 %v494, 8
    %v496 = vpop.permute.xlu0 %495
    %498 = vrot.lane.b32.xlu0 %v357, 8
    %v499 = vpop.permute.xlu0 %498
    %502 = vrot.lane.b32.xlu0 %v490, 40
    %v503 = vpop.permute.xlu0 %502
    %vm505 = vcmask 64512
    %v506 = vsel %vm505, %v436, %v496
    %vm507 = vcmask 326656
    %v508 = vsel %vm507, %v506, %v499
    %vm509 = vcmask 588800
    %v510 = vsel %vm509, %v508, %v503
    %vm511 = vcmask 850944
    %v512 = vsel %vm511, %v510, 0.0
    %513 = vst [vmem:[%s9] sm:$0x3] %v512
    // Predicated region
    $region50: #{decoder_step.1} parent=1 // pred_check
      _
    $region51: #{decoder_step.1} parent=1 // pred_check_branch
      %515 = sbr.rel (0) target = $region53
    $region52: #{decoder_step.1} parent=1 // pred_region
      _
    $region53: #{decoder_step.1} parent=1 // pred_fallthru
      _
    // Predicated region
    $region54: #{decoder_step.1} parent=1 // pred_check
      _
    $region55: #{decoder_step.1} parent=1 // pred_check_branch
      %517 = sbr.rel (0) target = $region57
    $region56: #{decoder_step.1} parent=1 // pred_region
      _
    $region57: #{decoder_step.1} parent=1 // pred_fallthru
      _
    %518 = vsyncpa [#allocation3], 1
    %519 = vsyncpa [#allocation5], 1

</llo_original>
